<compile_context>
chip_gen: v7x
topology: tpu7x:2x2x1
jax: 0.10.0
libtpu: 0.0.40
codegen_flags: <defaults>
</compile_context>

<pallas_src>
import functools

import jax
import jax.numpy as jnp
from jax.experimental import pallas as pl
from jax.experimental.pallas import tpu as pltpu

_LANES = 128  # lane width of the output padding


def _make_kernel(single_output: bool):
    """Build the fused MLP kernel. `single_output` selects the N=1 reduction path."""

    def kernel(x_ref, w1_ref, b1_ref, w2_ref, b2_ref, o_ref):
        # ---- layer 1: MXU matmul, f32 accumulation; bias + ReLU on the VPU ----
        h = jnp.dot(x_ref[...], w1_ref[...], preferred_element_type=jnp.float32)
        h = jnp.maximum(h + b1_ref[...].astype(jnp.float32), 0.0)

        if single_output:
            # output_size == 1: an MXU matmul with N=1 pads to the full MXU width and
            # pays a full push/drain for one column. Do a VPU multiply + cross-lane
            # (XLU) reduction instead.  w2_ref is (1, hidden) here.
            z = jnp.sum(h * w2_ref[...].astype(jnp.float32), axis=-1, keepdims=True)
            z = z + b2_ref[...].astype(jnp.float32)          # (1,1) broadcast
        else:
            # General path: W2 already zero-padded to a 128-multiple of columns, so the
            # result is lane-dense straight out of the MXU.
            z = jnp.dot(h, w2_ref[...].astype(jnp.float32),
                        preferred_element_type=jnp.float32)
            z = z + b2_ref[...].astype(jnp.float32)          # (1, out_pad) broadcast

        # Numerically stable sigmoid via EUP tanh: sigmoid(z) = 0.5 * (tanh(z/2) + 1).
        sig = 0.5 * (jnp.tanh(0.5 * z) + 1.0)

        # Lane-dense store: broadcast the (TB, 1) column across 128 lanes in the
        # single-output case so the store is a full, unmasked vst.
        o_ref[...] = jnp.broadcast_to(sig, o_ref.shape).astype(o_ref.dtype)

    return kernel


@functools.partial(jax.jit, static_argnames=("block_batch",))
def binary_classification_forward(x, w1, b1, w2, b2, *, block_batch=512):
    """sigmoid(relu(x @ W1 + b1) @ W2 + b2); returns (batch, output_size)."""
    batch, in_size = x.shape
    hidden = w1.shape[1]
    out_size = w2.shape[1]

    # ---- lane-dense output padding ----
    out_pad = pl.cdiv(out_size, _LANES) * _LANES

    # ---- batch tiling: TB multiple of 8 (8,128 sublane rule), batch padded to TB ----
    tb = min(block_batch, ((batch + 7) // 8) * 8)
    padded_batch = pl.cdiv(batch, tb) * tb
    x_p = jnp.pad(x, ((0, padded_batch - batch), (0, 0))) if padded_batch != batch else x
    grid = (padded_batch // tb,)

    single_output = out_size == 1
    b1_2d = b1.reshape(1, hidden)
    if single_output:
        w2_p = w2.reshape(hidden, 1).T          # (1, hidden) row for the VPU reduction
        b2_p = b2.reshape(1, 1)
        w2_spec = pl.BlockSpec((1, hidden), lambda i: (0, 0))
        b2_spec = pl.BlockSpec((1, 1), lambda i: (0, 0))
    else:
        # Pad W2/b2 once (outside the kernel) so the second GEMM output is lane-dense.
        w2_p = jnp.pad(w2, ((0, 0), (0, out_pad - out_size)))
        b2_p = jnp.pad(b2.reshape(1, -1), ((0, 0), (0, out_pad - out_size)))
        w2_spec = pl.BlockSpec((hidden, out_pad), lambda i: (0, 0))
        b2_spec = pl.BlockSpec((1, out_pad), lambda i: (0, 0))

    out_padded = pl.pallas_call(
        _make_kernel(single_output),
        out_shape=jax.ShapeDtypeStruct((padded_batch, out_pad), x.dtype),
        grid=grid,
        in_specs=[
            pl.BlockSpec((tb, in_size), lambda i: (i, 0)),       # x: tiled over batch
            pl.BlockSpec((in_size, hidden), lambda i: (0, 0)),   # W1: resident
            pl.BlockSpec((1, hidden), lambda i: (0, 0)),         # b1: resident
            w2_spec,                                             # W2: resident
            b2_spec,                                             # b2: resident
        ],
        out_specs=pl.BlockSpec((tb, out_pad), lambda i: (i, 0)),
        compiler_params=pltpu.CompilerParams(
            dimension_semantics=("parallel",),                   # v7x: shard batch across TCs
        ),
    )(x_p, w1, b1_2d, w2_p, b2_p)

    # Slice away the batch / lane padding outside the kernel.
    return out_padded[:batch, :out_size]


def init_params(key, input_size, hidden_size, output_size, dtype=jnp.float32):
    """Deterministic init matching PyTorch nn.Linear's U(-1/sqrt(fan_in), 1/sqrt(fan_in))."""
    k1, k2, k3, k4 = jax.random.split(key, 4)
    bound1 = 1.0 / (input_size ** 0.5)
    bound2 = 1.0 / (hidden_size ** 0.5)
    w1 = jax.random.uniform(k1, (input_size, hidden_size), dtype, -bound1, bound1)
    b1 = jax.random.uniform(k2, (hidden_size,), dtype, -bound1, bound1)
    w2 = jax.random.uniform(k3, (hidden_size, output_size), dtype, -bound2, bound2)
    b2 = jax.random.uniform(k4, (output_size,), dtype, -bound2, bound2)
    return w1, b1, w2, b2


def _ref_forward(x, w1, b1, w2, b2):
    return jax.nn.sigmoid(jnp.maximum(x @ w1 + b1, 0.0) @ w2 + b2)


if __name__ == "__main__":
    key = jax.random.PRNGKey(0)
    kx, kp, kx2, kp2 = jax.random.split(key, 4)

    # Case 1: canonical binary-classification shapes (output_size == 1, reduction path).
    input_size, hidden_size, output_size = 16, 32, 1
    batch = 8
    x = jax.random.normal(kx, (batch, input_size), dtype=jnp.float32)
    w1, b1, w2, b2 = init_params(kp, input_size, hidden_size, output_size)

    out = jax.block_until_ready(binary_classification_forward(x, w1, b1, w2, b2))
    ref = _ref_forward(x, w1, b1, w2, b2)
    assert out.shape == (batch, output_size)
    assert jnp.allclose(out, ref, atol=2e-5, rtol=1e-4)

    # Case 2: larger batch with tiling / padding (grid > 1) and output_size > 1 (MXU path).
    batch2, in2, hid2, out2 = 300, 16, 32, 3
    x2 = jax.random.normal(kx2, (batch2, in2), dtype=jnp.float32)
    w1b, b1b, w2b, b2b = init_params(kp2, in2, hid2, out2)
    out_b = jax.block_until_ready(
        binary_classification_forward(x2, w1b, b1b, w2b, b2b, block_batch=128))
    ref_b = _ref_forward(x2, w1b, b1b, w2b, b2b)
    assert out_b.shape == (batch2, out2)
    assert jnp.allclose(out_b, ref_b, atol=2e-5, rtol=1e-4)

    print("KERNEL_OK")
</pallas_src>

<mosaic_0001>
module attributes {stable_mosaic.version = 11 : i64} {
  func.func @kernel(%arg0: i32, %arg1: memref<8x16xf32, #tpu.memory_space<vmem>>, %arg2: memref<16x32xf32, #tpu.memory_space<vmem>>, %arg3: memref<1x32xf32, #tpu.memory_space<vmem>>, %arg4: memref<1x32xf32, #tpu.memory_space<vmem>>, %arg5: memref<1x1xf32, #tpu.memory_space<vmem>>, %arg6: memref<8x128xf32, #tpu.memory_space<vmem>>) attributes {dimension_semantics = [#tpu.dimension_semantics<parallel>], iteration_bounds = array<i64: 1>, scalar_prefetch = 0 : i64, scratch_operands = 0 : i64, tpu.core_type = #tpu.core_type<tc>, window_params = [{transform_indices = @transform_0, window_bounds = array<i64: 8, 16>}, {pipeline_mode = #tpu.pipeline_mode<synchronous>, transform_indices = @transform_1, window_bounds = array<i64: 16, 32>}, {pipeline_mode = #tpu.pipeline_mode<synchronous>, transform_indices = @transform_2, window_bounds = array<i64: 1, 32>}, {pipeline_mode = #tpu.pipeline_mode<synchronous>, transform_indices = @transform_3, window_bounds = array<i64: 1, 32>}, {pipeline_mode = #tpu.pipeline_mode<synchronous>, transform_indices = @transform_4, window_bounds = array<i64: 1, 1>}, {transform_indices = @transform_5, window_bounds = array<i64: 8, 128>}]} {
    %c0 = arith.constant 0 : index
    %c0_0 = arith.constant 0 : index
    %0 = vector.load %arg1[%c0, %c0_0] : memref<8x16xf32, #tpu.memory_space<vmem>>, vector<8x16xf32>
    %c0_1 = arith.constant 0 : index
    %c0_2 = arith.constant 0 : index
    %1 = vector.load %arg2[%c0_1, %c0_2] : memref<16x32xf32, #tpu.memory_space<vmem>>, vector<16x32xf32>
    %cst = arith.constant dense<0.000000e+00> : vector<8x32xf32>
    %2 = tpu.matmul %0, %1, %cst {dimension_numbers = #tpu.dot_dimension_numbers<[1], [0], [0], [1], [0, 0, 1, 1], [], []>} : vector<8x16xf32>, vector<16x32xf32>, vector<8x32xf32> -> vector<8x32xf32>
    %c0_3 = arith.constant 0 : index
    %c0_4 = arith.constant 0 : index
    %3 = vector.load %arg3[%c0_3, %c0_4] : memref<1x32xf32, #tpu.memory_space<vmem>>, vector<1x32xf32>
    %4 = vector.broadcast %3 : vector<1x32xf32> to vector<8x32xf32>
    %5 = arith.addf %2, %4 : vector<8x32xf32>
    %cst_5 = arith.constant 0.000000e+00 : f32
    %6 = vector.broadcast %cst_5 : f32 to vector<8x32xf32>
    %7 = arith.maximumf %5, %6 : vector<8x32xf32>
    %c0_6 = arith.constant 0 : index
    %c0_7 = arith.constant 0 : index
    %8 = vector.load %arg4[%c0_6, %c0_7] : memref<1x32xf32, #tpu.memory_space<vmem>>, vector<1x32xf32>
    %9 = vector.broadcast %8 : vector<1x32xf32> to vector<8x32xf32>
    %10 = arith.mulf %7, %9 : vector<8x32xf32>
    %cst_8 = arith.constant dense<0.000000e+00> : vector<8xf32>
    %11 = vector.multi_reduction <add>, %10, %cst_8 [1] : vector<8x32xf32> to vector<8xf32>
    %12 = vector.shape_cast %11 : vector<8xf32> to vector<8x1xf32>
    %c0_9 = arith.constant 0 : index
    %c0_10 = arith.constant 0 : index
    %13 = vector.load %arg5[%c0_9, %c0_10] : memref<1x1xf32, #tpu.memory_space<vmem>>, vector<1x1xf32>
    %14 = vector.broadcast %13 : vector<1x1xf32> to vector<8x1xf32>
    %15 = arith.addf %12, %14 : vector<8x1xf32>
    %cst_11 = arith.constant 5.000000e-01 : f32
    %16 = vector.broadcast %cst_11 : f32 to vector<8x1xf32>
    %17 = arith.mulf %16, %15 : vector<8x1xf32>
    %18 = math.tanh %17 : vector<8x1xf32>
    %cst_12 = arith.constant 1.000000e+00 : f32
    %19 = vector.broadcast %cst_12 : f32 to vector<8x1xf32>
    %20 = arith.addf %18, %19 : vector<8x1xf32>
    %cst_13 = arith.constant 5.000000e-01 : f32
    %21 = vector.broadcast %cst_13 : f32 to vector<8x1xf32>
    %22 = arith.mulf %21, %20 : vector<8x1xf32>
    %23 = vector.shape_cast %22 : vector<8x1xf32> to vector<8x1xf32>
    %24 = vector.broadcast %23 : vector<8x1xf32> to vector<8x128xf32>
    %c0_14 = arith.constant 0 : index
    %c0_15 = arith.constant 0 : index
    %25 = vector.load %arg6[%c0_14, %c0_15] : memref<8x128xf32, #tpu.memory_space<vmem>>, vector<8x128xf32>
    tpu.vector_store %arg6[%c0_14, %c0_15], %24 {strides = array<i32>} : memref<8x128xf32, #tpu.memory_space<vmem>>, vector<8x128xf32>,
    return
  }
  func.func @transform_0(%arg0: i32) -> (i32, i32) {
    %c0_i32 = arith.constant 0 : i32
    %c0_i32_0 = arith.constant 0 : i32
    return %arg0, %c0_i32 : i32, i32
  }
  func.func @transform_1(%arg0: i32) -> (i32, i32) {
    %c0_i32 = arith.constant 0 : i32
    %c0_i32_0 = arith.constant 0 : i32
    %c0_i32_1 = arith.constant 0 : i32
    return %c0_i32, %c0_i32_0 : i32, i32
  }
  func.func @transform_2(%arg0: i32) -> (i32, i32) {
    %c0_i32 = arith.constant 0 : i32
    %c0_i32_0 = arith.constant 0 : i32
    %c0_i32_1 = arith.constant 0 : i32
    return %c0_i32, %c0_i32_0 : i32, i32
  }
  func.func @transform_3(%arg0: i32) -> (i32, i32) {
    %c0_i32 = arith.constant 0 : i32
    %c0_i32_0 = arith.constant 0 : i32
    %c0_i32_1 = arith.constant 0 : i32
    return %c0_i32, %c0_i32_0 : i32, i32
  }
  func.func @transform_4(%arg0: i32) -> (i32, i32) {
    %c0_i32 = arith.constant 0 : i32
    %c0_i32_0 = arith.constant 0 : i32
    %c0_i32_1 = arith.constant 0 : i32
    return %c0_i32, %c0_i32_0 : i32, i32
  }
  func.func @transform_5(%arg0: i32) -> (i32, i32) {
    %c0_i32 = arith.constant 0 : i32
    %c0_i32_0 = arith.constant 0 : i32
    return %arg0, %c0_i32 : i32, i32
  }
}

</mosaic_0001>

<llo_original>
// kernel: binary_classification_forward.1
$region0: #{binary_classification_forward.1}
  #allocation0 [shape = 'u32[]', space=smem, size = 0x4, offset = 0x4, fixed_abs, tag = 'smem constant byte address 0x4 - core index']
  #allocation1 [shape = 'u32[144,128]{1,0:T(1,128)}', space=vmem, size = 0x12000, scoped, tag = 'internal scratch']
  #allocation2 [shape = 'f32[1,1]{1,0:T(1,128)S(1)}', space=vmem, size = 0x200, scoped, tag = 'scoped memory for binary_classification_forward.1']
  %s0 = inlined_call_operand.hbm [shape: f32[8,16], index: 0, kind: input, shape index: {}]
  %s1 = inlined_call_operand.vmem [shape: f32[16,32], index: 1, kind: input, shape index: {}]
  %s2 = inlined_call_operand.vmem [shape: f32[1,32], index: 2, kind: input, shape index: {}]
  %s3 = inlined_call_operand.vmem [shape: f32[1,32], index: 3, kind: input, shape index: {}]
  %s4 = inlined_call_operand.<no memory space> [shape: f32[1,1], index: 4, kind: input, shape index: {}]
  %s5 = inlined_call_operand.vmem [shape: f32[8,128], index: 5, kind: output, shape index: {}]
  %s6 = sld [smem:[#allocation0]]
  $region34: #{binary_classification_forward.1} parent=0
    _
  %s8 = ssub.s32 1, %s6
  %s9 = scalar_select 0, %s8, %s6
  %v10 = vstv %s4
  %11 = vst [vmem:[#allocation2] sm:$0x1] %v10
  $region1: #{binary_classification_forward.1} parent=0
    #allocation3 [shape = 'u8[4096]{0}', space=vmem, size = 0x1000, scoped, tag = 'input window, operand 0, single buffered']
    #allocation4 [shape = 's32[1]{0}', space=sflag, size = 0x4, scoped, tag = 'scoped memory for binary_classification_forward.1']
    %12 = vsyncpa [#allocation4], 0
    // Predicated region
    $region2: #{binary_classification_forward.1} parent=1 // pred_check
      _
    $region3: #{binary_classification_forward.1} parent=1 // pred_check_branch
      %14 = sbr.rel (0) target = $region5
    $region4: #{binary_classification_forward.1} parent=1 // pred_region
      %s16 = ssub.s32 128, 128
      %17 = vsyncadd [#allocation4], %s16
      %s19 = sshll.u32 [#allocation3], 4
      %s20 = int_to_ptr.vmem [resolvable:$true] %s19
      %22 = dma.hbm_to_vmem [thread:$0]  %s0, 128, %s20, [#allocation4]
    $region5: #{binary_classification_forward.1} parent=1 // pred_fallthru
      _
    // Predicated region
    $region6: #{binary_classification_forward.1} parent=1 // pred_check
      _
    $region7: #{binary_classification_forward.1} parent=1 // pred_check_branch
      %24 = sbr.rel (0) target = $region9
    $region8: #{binary_classification_forward.1} parent=1 // pred_region
      _
    $region9: #{binary_classification_forward.1} parent=1 // pred_fallthru
      _
    // Predicated region
    $region10: #{binary_classification_forward.1} parent=1 // pred_check
      _
    $region11: #{binary_classification_forward.1} parent=1 // pred_check_branch
      %26 = sbr.rel (0) target = $region13
    $region12: #{binary_classification_forward.1} parent=1 // pred_region
      _
    $region13: #{binary_classification_forward.1} parent=1 // pred_fallthru
      _
    // Predicated region
    $region14: #{binary_classification_forward.1} parent=1 // pred_check
      _
    $region15: #{binary_classification_forward.1} parent=1 // pred_check_branch
      %28 = sbr.rel (0) target = $region17
    $region16: #{binary_classification_forward.1} parent=1 // pred_region
      _
    $region17: #{binary_classification_forward.1} parent=1 // pred_fallthru
      _
    // Predicated region
    $region18: #{binary_classification_forward.1} parent=1 // pred_check
      _
    $region19: #{binary_classification_forward.1} parent=1 // pred_check_branch
      %30 = sbr.rel (0) target = $region21
    $region20: #{binary_classification_forward.1} parent=1 // pred_region
      _
    $region21: #{binary_classification_forward.1} parent=1 // pred_fallthru
      _
    // Predicated region
    $region22: #{binary_classification_forward.1} parent=1 // pred_check
      _
    $region23: #{binary_classification_forward.1} parent=1 // pred_check_branch
      %32 = sbr.rel (0) target = $region25
    $region24: #{binary_classification_forward.1} parent=1 // pred_region
      %33 = dma.done [#allocation4], 128
    $region25: #{binary_classification_forward.1} parent=1 // pred_fallthru
      _
    %v34 = vld [vmem:[#allocation3] sm:$0xff]
    %v35 = vld [vmem:[%s1] sm:$0xff]
    %v36 = vld [vmem:[%s1 + $0x8] sm:$0xff]
    %v37 = vld [vmem:[%s2] sm:$0x1]
    %v39 = vlaneseq
    %v40 = vshrl.u32 %v39, 7
    %v41 = vsub.s32 0, %v40
    %v42 = vrot.slane %v37, %v41
    %vm44 = vcmask 130048
    %v46 = vsel %vm44, %v34, 0
    %48 = vmatprep.subr.mxu0 0.0
    %49 = vmatpush1.msra.mxu0 %v35
    %50 = vmatprep.subr.mxu0 0.0
    %51 = vmatpush1.msra.mxu0 %v36
    %52 = vmatprep.subr.mxu0 0.0
    %53 = vmatpush1.msra.mxu0 0.0
    %54 = vmatprep.subr.mxu0 0.0
    %55 = vmatpush1.msra.mxu0 0.0
    %56 = vmatprep.subr.mxu0 0.0
    %57 = vmatpush1.msra.mxu0 0.0
    %58 = vmatprep.subr.mxu0 0.0
    %59 = vmatpush1.msra.mxu0 0.0
    %60 = vmatprep.subr.mxu0 0.0
    %61 = vmatpush1.msra.mxu0 0.0
    %62 = vmatprep.subr.mxu0 0.0
    %63 = vmatpush1.msra.mxu0 0.0
    %64 = vmatprep.subr.mxu0 0.0
    %65 = vmatpush1.msra.mxu0 0.0
    %66 = vmatprep.subr.mxu0 0.0
    %67 = vmatpush1.msra.mxu0 0.0
    %68 = vmatprep.subr.mxu0 0.0
    %69 = vmatpush1.msra.mxu0 0.0
    %70 = vmatprep.subr.mxu0 0.0
    %71 = vmatpush1.msra.mxu0 0.0
    %72 = vmatprep.subr.mxu0 0.0
    %73 = vmatpush1.msra.mxu0 0.0
    %74 = vmatprep.subr.mxu0 0.0
    %75 = vmatpush1.msra.mxu0 0.0
    %76 = vmatprep.subr.mxu0 0.0
    %77 = vmatpush1.msra.mxu0 0.0
    %78 = vmatprep.subr.mxu0 0.0
    %79 = vmatpush1.msra.mxu0 0.0
    %80 = vmatprep.subr.mxu0 0.0
    %81 = vmatpush1.msra.mxu0 0.0
    %82 = vmatprep.subr.mxu0 0.0
    %83 = vmatpush1.msra.mxu0 0.0
    %84 = vmatprep.subr.mxu0 0.0
    %85 = vmatpush1.msra.mxu0 0.0
    %86 = vmatprep.subr.mxu0 0.0
    %87 = vmatpush1.msra.mxu0 0.0
    %88 = vmatprep.subr.mxu0 0.0
    %89 = vmatpush1.msra.mxu0 0.0
    %90 = vmatprep.subr.mxu0 0.0
    %91 = vmatpush1.msra.mxu0 0.0
    %92 = vmatprep.subr.mxu0 0.0
    %93 = vmatpush1.msra.mxu0 0.0
    %94 = vmatprep.subr.mxu0 0.0
    %95 = vmatpush1.msra.mxu0 0.0
    %96 = vmatprep.subr.mxu0 0.0
    %97 = vmatpush1.msra.mxu0 0.0
    %98 = vmatprep.subr.mxu0 0.0
    %99 = vmatpush1.msra.mxu0 0.0
    %100 = vmatprep.subr.mxu0 0.0
    %101 = vmatpush1.msra.mxu0 0.0
    %102 = vmatprep.subr.mxu0 0.0
    %103 = vmatpush1.msra.mxu0 0.0
    %104 = vmatprep.subr.mxu0 0.0
    %105 = vmatpush1.msra.mxu0 0.0
    %106 = vmatprep.subr.mxu0 0.0
    %107 = vmatpush1.msra.mxu0 0.0
    %108 = vmatprep.subr.mxu0 0.0
    %109 = vmatpush1.msra.mxu0 0.0
    %110 = vmatprep.subr.mxu0 0.0
    %111 = vmatpush1.msra.mxu0 0.0
    %112 = vmatprep.mubr.f32.mxu0 0.0
    %113 = vmatmul.mubr.f32.gmra.mrb[0].mxu0 %v46
    %v114 = vpop.f32.mrb[0].mxu0
    %v115 = vadd.f32 %v42, %v114
    %v116 = vpop.f32.mrb[0].mxu0
    %117 = vdwg.mxu0
    %v118 = vmax.f32 %v115, 0.0
    %v119 = vld [vmem:[%s3] sm:$0x1]
    %v121 = vlaneseq
    %v122 = vshrl.u32 %v121, 7
    %v123 = vsub.s32 0, %v122
    %v124 = vrot.slane %v119, %v123
    %v126 = vmul.f32 %v118, %v124
    %vm127 = vcmask 261120
    %v128 = vsel %vm127, %v126, 0.0
    %129 = vadd.xlane.f32.xlu0 %v128
    %v130 = vpop.xlane.xlu0 %129
    %v131 = vld [vmem:[#allocation2] sm:$0x1]
    %v133 = vlaneseq
    %v134 = vshrl.u32 %v133, 7
    %v135 = vsub.s32 0, %v134
    %v136 = vrot.slane %v131, %v135
    %v138 = vadd.f32 %v130, %v136
    %v139 = vmul.f32 %v138, 0.5
    %v140 = vtanh.pop %v139
    %v141 = vadd.f32 %v140, 1.0
    %v142 = vmul.f32 %v141, 0.5
    %144 = vset.pattern.permute.xlu0 0
    %145 = vperm.xlu0 %144, %v142
    %v146 = vpop.permute.xlu0 %145
    %148 = vst [vmem:[%s5] sm:$0xff] %v146
    // Predicated region
    $region26: #{binary_classification_forward.1} parent=1 // pred_check
      _
    $region27: #{binary_classification_forward.1} parent=1 // pred_check_branch
      %150 = sbr.rel (0) target = $region29
    $region28: #{binary_classification_forward.1} parent=1 // pred_region
      _
    $region29: #{binary_classification_forward.1} parent=1 // pred_fallthru
      _
    // Predicated region
    $region30: #{binary_classification_forward.1} parent=1 // pred_check
      _
    $region31: #{binary_classification_forward.1} parent=1 // pred_check_branch
      %152 = sbr.rel (0) target = $region33
    $region32: #{binary_classification_forward.1} parent=1 // pred_region
      _
    $region33: #{binary_classification_forward.1} parent=1 // pred_fallthru
      _
    %153 = vsyncpa [#allocation4], 1

</llo_original>
